<compile_context>
chip_gen: v7x
topology: tpu7x:2x2x1
jax: 0.10.0
libtpu: 0.0.40
codegen_flags: <defaults>
</compile_context>

<pallas_src>
import jax
import jax.numpy as jnp
from jax.experimental import pallas as pl
from jax.experimental.pallas import tpu as pltpu

LANES = 128          # lane width
BLOCK_R = 2048       # rows per block in the two-pass path -> (2048,128) f32 = 1 MiB
FAST_MAX_ELEMS = 256 * 1024   # whole-tensor-in-VMEM fused path threshold


def _fused_kernel(x_ref, o_ref):
    """Single-shot: masked min + elementwise step, tensor fully VMEM-resident."""
    x = x_ref[...].astype(jnp.float32)
    masked = jnp.where(x > 0, x, jnp.inf)
    m = jnp.min(masked)                       # nonzero min (one reduce, once)
    inv = 1.0 / m                             # scalar reciprocal, multiply below
    r = jnp.maximum(x, 0.0)                   # relu
    c = jnp.minimum(r, m)                     # clamp(max=nonzero_min)
    o_ref[...] = (c * inv).astype(o_ref.dtype)


def _partial_min_kernel(x_ref, pmin_ref):
    """Per-block partial min over positive elements, kept vreg-shaped (8,128).

    The reduction over the leading (row-group) axis is pure VPU element-wise
    min; no per-iteration full cross-lane XLU reduce, no accumulator carried
    across the grid -> every grid step is independent ("parallel")."""
    x = x_ref[...].astype(jnp.float32)
    masked = jnp.where(x > 0, x, jnp.inf)
    pmin_ref[...] = jnp.min(masked.reshape(-1, 8, LANES), axis=0)


def _step_kernel(m_ref, x_ref, o_ref):
    """Elementwise: clamp(relu(x), max=m) * (1/m), m read once from SMEM."""
    m = m_ref[0, 0]
    inv = 1.0 / m
    x = x_ref[...].astype(jnp.float32)
    r = jnp.maximum(x, 0.0)
    c = jnp.minimum(r, m)
    o_ref[...] = (c * inv).astype(o_ref.dtype)


def differentiable_step_unit(x):
    orig_shape = x.shape
    orig_dtype = x.dtype
    n = x.size
    flat = x.reshape(-1)

    if n <= FAST_MAX_ELEMS:
        # ---- fused single-call path: 1 read + 1 write, one launch ----
        pad = (-n) % LANES
        if pad:
            flat = jnp.pad(flat, (0, pad))          # zeros: never positive
        rows = flat.size // LANES
        x2 = flat.reshape(rows, LANES)
        out2 = pl.pallas_call(
            _fused_kernel,
            out_shape=jax.ShapeDtypeStruct((rows, LANES), orig_dtype),
            grid=(1,),
            in_specs=[pl.BlockSpec((rows, LANES), lambda i: (0, 0))],
            out_specs=pl.BlockSpec((rows, LANES), lambda i: (0, 0)),
        )(x2)
        return out2.reshape(-1)[:n].reshape(orig_shape)

    # ---- large-tensor two-pass path with big blocks ----
    blk_elems = BLOCK_R * LANES
    pad = (-n) % blk_elems
    if pad:
        flat = jnp.pad(flat, (0, pad))              # zeros: never positive
    rows = flat.size // LANES
    x2 = flat.reshape(rows, LANES)
    n_blocks = rows // BLOCK_R

    # Pass 1: per-block (8,128) partial mins, fully parallel grid (megacore-ok).
    partials = pl.pallas_call(
        _partial_min_kernel,
        out_shape=jax.ShapeDtypeStruct((n_blocks * 8, LANES), jnp.float32),
        grid=(n_blocks,),
        in_specs=[pl.BlockSpec((BLOCK_R, LANES), lambda i: (i, 0))],
        out_specs=pl.BlockSpec((8, LANES), lambda i: (i, 0)),
        compiler_params=pltpu.CompilerParams(
            dimension_semantics=("parallel",)),
    )(x2)

    # Tiny final reduce outside the kernel; scalar lives in SMEM for pass 2.
    m_arr = jnp.min(partials).reshape(1, 1)

    # Pass 2: elementwise step, native-dtype in/out, f32 math in-kernel.
    out2 = pl.pallas_call(
        _step_kernel,
        out_shape=jax.ShapeDtypeStruct((rows, LANES), orig_dtype),
        grid=(n_blocks,),
        in_specs=[
            pl.BlockSpec(memory_space=pltpu.SMEM),            # (1,1) scalar
            pl.BlockSpec((BLOCK_R, LANES), lambda i: (i, 0)),  # x block
        ],
        out_specs=pl.BlockSpec((BLOCK_R, LANES), lambda i: (i, 0)),
        compiler_params=pltpu.CompilerParams(
            dimension_semantics=("parallel",)),
    )(m_arr, x2)

    return out2.reshape(-1)[:n].reshape(orig_shape)


def _reference(x):
    nzmin = jnp.min(jnp.where(x > 0, x, jnp.inf))
    return jnp.minimum(jnp.maximum(x, 0.0), nzmin) / nzmin


if __name__ == "__main__":
    # NCHW input, small shape; random normal guarantees some positive entries.
    x = jax.random.normal(jax.random.PRNGKey(0), (2, 4, 16, 16), dtype=jnp.float32)
    out = jax.block_until_ready(differentiable_step_unit(x))
    assert out.shape == x.shape and out.dtype == x.dtype
    assert jnp.allclose(out, _reference(x), atol=1e-6), "mismatch (fused path)"

    # Exercise the padded fast path (size not a multiple of 128).
    x_pad = jax.random.normal(jax.random.PRNGKey(1), (3, 5, 10, 7), dtype=jnp.float32)
    out_pad = jax.block_until_ready(differentiable_step_unit(x_pad))
    assert jnp.allclose(out_pad, _reference(x_pad), atol=1e-6), "mismatch (padded path)"

    # Exercise the big-tensor two-pass path.
    x_big = jax.random.normal(jax.random.PRNGKey(2), (2, 8, 256, 256), dtype=jnp.float32)
    out_big = jax.block_until_ready(differentiable_step_unit(x_big))
    assert out_big.dtype == x_big.dtype
    assert jnp.allclose(out_big, _reference(x_big), atol=1e-6), "mismatch (two-pass path)"

    print("KERNEL_OK")
</pallas_src>

<mosaic_0001>
module attributes {stable_mosaic.version = 11 : i64} {
  func.func @_fused_kernel(%arg0: i32, %arg1: memref<16x128xf32, #tpu.memory_space<vmem>>, %arg2: memref<16x128xf32, #tpu.memory_space<vmem>>) attributes {dimension_semantics = [#tpu.dimension_semantics<arbitrary>], iteration_bounds = array<i64: 1>, scalar_prefetch = 0 : i64, scratch_operands = 0 : i64, tpu.core_type = #tpu.core_type<tc>, window_params = [{pipeline_mode = #tpu.pipeline_mode<synchronous>, transform_indices = @transform_0, window_bounds = array<i64: 16, 128>}, {pipeline_mode = #tpu.pipeline_mode<synchronous>, transform_indices = @transform_1, window_bounds = array<i64: 16, 128>}]} {
    %c0 = arith.constant 0 : index
    %c0_0 = arith.constant 0 : index
    %0 = vector.load %arg1[%c0, %c0_0] : memref<16x128xf32, #tpu.memory_space<vmem>>, vector<16x128xf32>
    %cst = arith.constant 0.000000e+00 : f32
    %1 = vector.broadcast %cst : f32 to vector<16x128xf32>
    %2 = arith.cmpf ogt, %0, %1 : vector<16x128xf32>
    %cst_1 = arith.constant 0x7F800000 : f32
    %3 = vector.broadcast %cst_1 : f32 to vector<16x128xf32>
    %4 = arith.select %2, %0, %3 : vector<16x128xi1>, vector<16x128xf32>
    %5 = vector.shape_cast %4 : vector<16x128xf32> to vector<1x16x128xf32>
    %cst_2 = arith.constant dense<0x7F800000> : vector<1xf32>
    %6 = vector.multi_reduction <minimumf>, %5, %cst_2 [1, 2] : vector<1x16x128xf32> to vector<1xf32>
    %7 = vector.shape_cast %6 : vector<1xf32> to vector<1x1x1xf32>
    %8 = vector.extract %7[0, 0, 0] : f32 from vector<1x1x1xf32>
    %cst_3 = arith.constant 1.000000e+00 : f32
    %9 = arith.divf %cst_3, %8 : f32
    %cst_4 = arith.constant 0.000000e+00 : f32
    %10 = vector.broadcast %cst_4 : f32 to vector<16x128xf32>
    %11 = arith.maximumf %0, %10 : vector<16x128xf32>
    %12 = vector.broadcast %8 : f32 to vector<16x128xf32>
    %13 = arith.minimumf %11, %12 : vector<16x128xf32>
    %14 = vector.broadcast %9 : f32 to vector<16x128xf32>
    %15 = arith.mulf %13, %14 : vector<16x128xf32>
    %c0_5 = arith.constant 0 : index
    %c0_6 = arith.constant 0 : index
    %16 = vector.load %arg2[%c0_5, %c0_6] : memref<16x128xf32, #tpu.memory_space<vmem>>, vector<16x128xf32>
    tpu.vector_store %arg2[%c0_5, %c0_6], %15 {strides = array<i32>} : memref<16x128xf32, #tpu.memory_space<vmem>>, vector<16x128xf32>,
    return
  }
  func.func @transform_0(%arg0: i32) -> (i32, i32) {
    %c0_i32 = arith.constant 0 : i32
    %c0_i32_0 = arith.constant 0 : i32
    %c0_i32_1 = arith.constant 0 : i32
    return %c0_i32, %c0_i32_0 : i32, i32
  }
  func.func @transform_1(%arg0: i32) -> (i32, i32) {
    %c0_i32 = arith.constant 0 : i32
    %c0_i32_0 = arith.constant 0 : i32
    %c0_i32_1 = arith.constant 0 : i32
    return %c0_i32, %c0_i32_0 : i32, i32
  }
}

</mosaic_0001>

<llo_original>
// kernel: tpu_custom_call.1
$region0: #{tpu_custom_call.1}
  #allocation0 [shape = 'u32[]', space=smem, size = 0x4, offset = 0x4, fixed_abs, tag = 'smem constant byte address 0x4 - core index']
  #allocation1 [shape = 'u32[144,128]{1,0:T(1,128)}', space=vmem, size = 0x12000, scoped, tag = 'internal scratch']
  %s0 = inlined_call_operand.hbm [shape: f32[16,128], index: 0, kind: input, shape index: {}]
  %s1 = inlined_call_operand.hbm [shape: f32[16,128], index: 1, kind: output, shape index: {}]
  %s2 = sld [smem:[#allocation0]]
  $region18: #{tpu_custom_call.1} parent=0
    _
  %s4 = ssub.s32 1, %s2
  %s5 = scalar_select 0, %s4, %s2
  $region1: #{tpu_custom_call.1} parent=0
    #allocation2 [shape = 'u8[8192]{0}', space=vmem, size = 0x2000, scoped, tag = 'input window, operand 0, single buffered']
    #allocation3 [shape = 's32[1]{0}', space=sflag, size = 0x4, scoped, tag = 'scoped memory for tpu_custom_call.1']
    #allocation4 [shape = 's32[1]{0}', space=sflag, size = 0x4, scoped, tag = 'scoped memory for tpu_custom_call.1']
    #allocation5 [shape = 'u8[8192]{0}', space=vmem, size = 0x2000, scoped, tag = 'output window, operand 0, single buffered']
    %6 = vsyncpa [#allocation3], 0
    %7 = vsyncpa [#allocation4], 0
    // Predicated region
    $region2: #{tpu_custom_call.1} parent=1 // pred_check
      _
    $region3: #{tpu_custom_call.1} parent=1 // pred_check_branch
      %9 = sbr.rel (0) target = $region5
    $region4: #{tpu_custom_call.1} parent=1 // pred_region
      %s11 = ssub.s32 256, 256
      %12 = vsyncadd [#allocation3], %s11
      %s13 = sshll.u32 [#allocation2], 4
      %s14 = int_to_ptr.vmem [resolvable:$true] %s13
      %19 = dma.hbm_to_vmem [thread:$0]  %s0, 256, %s14, [#allocation3], 128, 128, 8
    $region5: #{tpu_custom_call.1} parent=1 // pred_fallthru
      _
    // Predicated region
    $region6: #{tpu_custom_call.1} parent=1 // pred_check
      _
    $region7: #{tpu_custom_call.1} parent=1 // pred_check_branch
      %21 = sbr.rel (0) target = $region9
    $region8: #{tpu_custom_call.1} parent=1 // pred_region
      %22 = dma.done [#allocation3], 256
    $region9: #{tpu_custom_call.1} parent=1 // pred_fallthru
      _
    %v23 = vld [vmem:[#allocation2] sm:$0xff]
    %v24 = vld [vmem:[#allocation2 + $0x8] sm:$0xff]
    %vm25 = vcmp.gt.f32.partialorder %v23, 0.0
    %vm26 = vcmp.gt.f32.partialorder %v24, 0.0
    %v27 = vsel %vm25, %v23, inf
    %v28 = vsel %vm26, %v24, inf
    %v29 = vmin.f32 %v27, %v28
    %30 = vmin.xlane.f32.xlu0 %v29
    %v31 = vpop.xlane.xlu0 %30
    %v32 = vrot.slane %v31, 4
    %v33 = vmin.f32 %v31, %v32
    %v34 = vrot.slane %v33, 2
    %v35 = vmin.f32 %v33, %v34
    %v36 = vrot.slane %v35, 1
    %v37 = vmin.f32 %v35, %v36
    %s38 = vtos %v37
    %v39 = vstv %s38
    %v40 = vrcp.pop %v39
    %s41 = vtos %v40
    %v42 = vmax.f32 %v23, 0.0
    %v43 = vmax.f32 %v24, 0.0
    %v44 = vstv %s38
    %v45 = vmin.f32 %v42, %v44
    %v46 = vmin.f32 %v43, %v44
    %v47 = vstv %s41
    %v48 = vmul.f32 %v45, %v47
    %v49 = vmul.f32 %v46, %v47
    %50 = vst [vmem:[#allocation5] sm:$0xff] %v48
    %51 = vst [vmem:[#allocation5 + $0x8] sm:$0xff] %v49
    // Predicated region
    $region10: #{tpu_custom_call.1} parent=1 // pred_check
      _
    $region11: #{tpu_custom_call.1} parent=1 // pred_check_branch
      %53 = sbr.rel (0) target = $region13
    $region12: #{tpu_custom_call.1} parent=1 // pred_region
      %s55 = ssub.s32 256, 256
      %56 = vsyncadd [#allocation4], %s55
      %s57 = sshll.u32 [#allocation5], 4
      %s58 = int_to_ptr.vmem [resolvable:$true] %s57
      %63 = dma.vmem_to_hbm [thread:$0]  %s58, 256, %s1, [#allocation4], 128, 128, 8
    $region13: #{tpu_custom_call.1} parent=1 // pred_fallthru
      _
    // Predicated region
    $region14: #{tpu_custom_call.1} parent=1 // pred_check
      _
    $region15: #{tpu_custom_call.1} parent=1 // pred_check_branch
      %65 = sbr.rel (0) target = $region17
    $region16: #{tpu_custom_call.1} parent=1 // pred_region
      %66 = dma.done [#allocation4], 256
    $region17: #{tpu_custom_call.1} parent=1 // pred_fallthru
      _
    %67 = vsyncpa [#allocation3], 1
    %68 = vsyncpa [#allocation4], 1

</llo_original>
